<compile_context>
chip_gen: v5e
topology: v5e:2x2
jax: 0.10.0
libtpu: 0.0.40
codegen_flags: <defaults>
</compile_context>

<pallas_src>
import functools

import jax
import jax.numpy as jnp
from jax.experimental import pallas as pl
from jax.experimental.pallas import tpu as pltpu

BN_EPS = 1e-5


def _round_up(x, m):
    return ((x + m - 1) // m) * m


def basic_block_kernel(x_ref, w_ref, gamma_ref, beta_ref, o_ref, acc_ref, *, inv_n):
    k = pl.program_id(1)

    @pl.when(k == 0)
    def _():
        acc_ref[...] = jnp.zeros_like(acc_ref)

    # Linear (bias-free: the Linear bias is a per-feature constant and cancels
    # exactly under training-mode BatchNorm).  w_ref is the PyTorch-layout
    # [TILE_F, TILE_K] tile; contract the last axis of both operands.
    acc_ref[...] += jax.lax.dot_general(
        x_ref[...], w_ref[...],
        dimension_numbers=(((1,), (1,)), ((), ())),
        preferred_element_type=jnp.float32,
    )                                                     # [N, TILE_F], f32 accumulation

    @pl.when(k == pl.num_programs(1) - 1)
    def _():
        y = acc_ref[...]                                  # [N, TILE_F] f32
        # BatchNorm1d, training mode: single reduction pass (sum + sum of squares).
        s = jnp.sum(y, axis=0, keepdims=True)             # [1, TILE_F]
        ss = jnp.sum(y * y, axis=0, keepdims=True)        # [1, TILE_F]
        mean = s * inv_n
        var = jnp.maximum(ss * inv_n - mean * mean, 0.0)  # biased variance, clamped >= 0
        inv_std = jax.lax.rsqrt(var + BN_EPS)             # EUP, f32

        # Fold affine into scale/shift: out = relu(y * scale + shift).
        scale = inv_std * gamma_ref[...]                  # [1, TILE_F]
        shift = beta_ref[...] - mean * scale              # [1, TILE_F]
        o_ref[...] = jnp.maximum(y * scale + shift, 0.0).astype(o_ref.dtype)


def basic_block(x, weight, bias, gamma, beta, *, tile_f_cap=512, tile_k_cap=512):
    """x: [N, F_in] f32; weight: [F_out, F_in] (PyTorch layout); bias/gamma/beta: [F_out].

    `bias` is accepted for API parity but not read: it is exactly cancelled by the
    training-mode BatchNorm that immediately follows the Linear layer.
    """
    del bias
    n, f_in = x.shape
    f_out = weight.shape[0]

    # Lane-dense feature tiling: pad F_out up to a multiple of the tile width (>=128).
    tile_f = min(tile_f_cap, _round_up(f_out, 128))
    f_out_pad = _round_up(f_out, tile_f)
    pad_f = f_out_pad - f_out

    # Contraction (K) tiling: single full-width step when F_in is small, otherwise
    # tile at tile_k_cap and zero-pad F_in (zeros contribute nothing to the matmul).
    if f_in <= tile_k_cap:
        tile_k, f_in_pad = f_in, f_in
    else:
        tile_k = tile_k_cap
        f_in_pad = _round_up(f_in, tile_k)
    pad_k = f_in_pad - f_in

    # bf16 matmul inputs (halve HBM traffic, ~2x MXU throughput); BN params stay f32.
    x_bf = jnp.pad(x, ((0, 0), (0, pad_k))).astype(jnp.bfloat16)           # [N, F_in_pad]
    w_bf = jnp.pad(weight, ((0, pad_f), (0, pad_k))).astype(jnp.bfloat16)  # [F_out_pad, F_in_pad]
    g2 = jnp.pad(gamma, (0, pad_f)).reshape(1, f_out_pad).astype(jnp.float32)
    bt2 = jnp.pad(beta, (0, pad_f)).reshape(1, f_out_pad).astype(jnp.float32)

    grid = (f_out_pad // tile_f, f_in_pad // tile_k)

    # Explicit VMEM budget: double-buffered input/output tiles + the f32 accumulator.
    vmem_needed = (
        2 * (n * tile_k * 2            # x tile (bf16)
             + tile_f * tile_k * 2     # weight tile (bf16)
             + 2 * tile_f * 4          # gamma/beta tiles (f32)
             + n * tile_f * 4)         # output tile (f32)
        + n * tile_f * 4               # accumulator scratch (f32, single copy)
    )
    vmem_limit = int(min(max(2 * vmem_needed + (4 << 20), 16 << 20), 64 << 20))

    kernel = functools.partial(basic_block_kernel, inv_n=float(1.0 / n))

    out_pad = pl.pallas_call(
        kernel,
        out_shape=jax.ShapeDtypeStruct((n, f_out_pad), jnp.float32),
        grid=grid,
        in_specs=[
            # Full batch, K-tile of features per step.
            pl.BlockSpec((n, tile_k), lambda j, k: (0, k)),
            # Weight tile follows (feature, K) grid axes in PyTorch layout.
            pl.BlockSpec((tile_f, tile_k), lambda j, k: (j, k)),
            pl.BlockSpec((1, tile_f), lambda j, k: (0, j)),
            pl.BlockSpec((1, tile_f), lambda j, k: (0, j)),
        ],
        # Same output block across K -> resident accumulator tile; written only at k==last.
        out_specs=pl.BlockSpec((n, tile_f), lambda j, k: (0, j)),
        scratch_shapes=[pltpu.VMEM((n, tile_f), jnp.float32)],
        compiler_params=pltpu.CompilerParams(
            dimension_semantics=("parallel", "arbitrary"),
            vmem_limit_bytes=vmem_limit,
        ),
    )(x_bf, w_bf, g2, bt2)

    return out_pad[:, :f_out]


def basic_block_ref_f32(x, weight, bias, gamma, beta):
    """Pure-f32 JAX reference (PyTorch BasicBlock forward, training-mode BN)."""
    y = x @ weight.T + bias
    mean = jnp.mean(y, axis=0, keepdims=True)
    var = jnp.mean((y - mean) ** 2, axis=0, keepdims=True)
    y_bn = (y - mean) / jnp.sqrt(var + BN_EPS) * gamma + beta
    return jnp.maximum(y_bn, 0.0)


def basic_block_ref_matched(x, weight, gamma, beta):
    """Reference with the kernel's precision/fold policy: bf16 matmul inputs, f32 BN,
    bias folded out (exact cancellation), affine folded into scale/shift."""
    y = jnp.dot(x.astype(jnp.bfloat16), weight.astype(jnp.bfloat16).T,
                preferred_element_type=jnp.float32)
    n = y.shape[0]
    s = jnp.sum(y, axis=0, keepdims=True)
    ss = jnp.sum(y * y, axis=0, keepdims=True)
    mean = s / n
    var = jnp.maximum(ss / n - mean * mean, 0.0)
    inv_std = jax.lax.rsqrt(var + BN_EPS)
    scale = inv_std * gamma
    shift = beta - mean * scale
    return jnp.maximum(y * scale + shift, 0.0)


if __name__ == "__main__":
    key = jax.random.PRNGKey(0)
    n, input_dim, output_dim = 8, 32, 64

    kx, kw, kb = jax.random.split(key, 3)
    x = jax.random.normal(kx, (n, input_dim), dtype=jnp.float32)
    # Deterministic "init": weight/bias like nn.Linear, gamma/beta like BatchNorm1d.
    bound = 1.0 / (input_dim ** 0.5)
    weight = jax.random.uniform(kw, (output_dim, input_dim),
                                minval=-bound, maxval=bound, dtype=jnp.float32)
    bias = jax.random.uniform(kb, (output_dim,),
                              minval=-bound, maxval=bound, dtype=jnp.float32)
    gamma = jnp.ones((output_dim,), dtype=jnp.float32)
    beta = jnp.zeros((output_dim,), dtype=jnp.float32)

    out = basic_block(x, weight, bias, gamma, beta)
    out = jax.block_until_ready(out)
    assert out.shape == (n, output_dim)

    # Tight check against a reference that uses the same precision/fold policy.
    ref_matched = basic_block_ref_matched(x, weight, gamma, beta)
    assert jnp.allclose(out, ref_matched, atol=1e-3, rtol=1e-3), \
        float(jnp.max(jnp.abs(out - ref_matched)))

    # Looser check against the pure-f32 PyTorch-semantics reference (bf16 matmul inputs).
    ref_f32 = basic_block_ref_f32(x, weight, bias, gamma, beta)
    assert jnp.allclose(out, ref_f32, atol=5e-2, rtol=5e-2), \
        float(jnp.max(jnp.abs(out - ref_f32)))

    print("KERNEL_OK")
</pallas_src>

<mosaic_0001>
module attributes {stable_mosaic.version = 11 : i64} {
  func.func @basic_block_kernel(%arg0: i32, %arg1: i32, %arg2: memref<8x32xbf16, #tpu.memory_space<vmem>>, %arg3: memref<128x32xbf16, #tpu.memory_space<vmem>>, %arg4: memref<1x128xf32, #tpu.memory_space<vmem>>, %arg5: memref<1x128xf32, #tpu.memory_space<vmem>>, %arg6: memref<8x128xf32, #tpu.memory_space<vmem>>, %arg7: memref<8x128xf32, #tpu.memory_space<vmem>>) attributes {dimension_semantics = [#tpu.dimension_semantics<parallel>, #tpu.dimension_semantics<arbitrary>], iteration_bounds = array<i64: 1, 1>, scalar_prefetch = 0 : i64, scratch_operands = 1 : i64, tpu.core_type = #tpu.core_type<tc>, window_params = [{transform_indices = @transform_0, window_bounds = array<i64: 8, 32>}, {transform_indices = @transform_1, window_bounds = array<i64: 128, 32>}, {transform_indices = @transform_2, window_bounds = array<i64: 1, 128>}, {transform_indices = @transform_3, window_bounds = array<i64: 1, 128>}, {transform_indices = @transform_4, window_bounds = array<i64: 8, 128>}]} {
    %c0_i32 = arith.constant 0 : i32
    %0 = arith.cmpi eq, %arg1, %c0_i32 : i32
    %1 = arith.extui %0 : i1 to i32
    %c0_i32_0 = arith.constant 0 : i32
    %2 = arith.cmpi ne, %1, %c0_i32_0 : i32
    scf.if %2 {
      %cst_10 = arith.constant 0.000000e+00 : f32
      %12 = vector.broadcast %cst_10 : f32 to vector<8x128xf32>
      %c0_11 = arith.constant 0 : index
      %c0_12 = arith.constant 0 : index
      %13 = vector.load %arg7[%c0_11, %c0_12] : memref<8x128xf32, #tpu.memory_space<vmem>>, vector<8x128xf32>
      tpu.vector_store %arg7[%c0_11, %c0_12], %12 {strides = array<i32>} : memref<8x128xf32, #tpu.memory_space<vmem>>, vector<8x128xf32>,
    } else {
    }
    %c0 = arith.constant 0 : index
    %c0_1 = arith.constant 0 : index
    %3 = vector.load %arg7[%c0, %c0_1] : memref<8x128xf32, #tpu.memory_space<vmem>>, vector<8x128xf32>
    %c0_2 = arith.constant 0 : index
    %c0_3 = arith.constant 0 : index
    %4 = vector.load %arg2[%c0_2, %c0_3] : memref<8x32xbf16, #tpu.memory_space<vmem>>, vector<8x32xbf16>
    %c0_4 = arith.constant 0 : index
    %c0_5 = arith.constant 0 : index
    %5 = vector.load %arg3[%c0_4, %c0_5] : memref<128x32xbf16, #tpu.memory_space<vmem>>, vector<128x32xbf16>
    %cst = arith.constant dense<0.000000e+00> : vector<8x128xf32>
    %6 = tpu.matmul %4, %5, %cst {dimension_numbers = #tpu.dot_dimension_numbers<[1], [1], [0], [0], [0, 0, 1, 0], [], []>} : vector<8x32xbf16>, vector<128x32xbf16>, vector<8x128xf32> -> vector<8x128xf32>
    %7 = arith.addf %3, %6 : vector<8x128xf32>
    %c0_6 = arith.constant 0 : index
    %c0_7 = arith.constant 0 : index
    %8 = vector.load %arg7[%c0_6, %c0_7] : memref<8x128xf32, #tpu.memory_space<vmem>>, vector<8x128xf32>
    tpu.vector_store %arg7[%c0_6, %c0_7], %7 {strides = array<i32>} : memref<8x128xf32, #tpu.memory_space<vmem>>, vector<8x128xf32>,
    %c0_i32_8 = arith.constant 0 : i32
    %9 = arith.cmpi eq, %arg1, %c0_i32_8 : i32
    %10 = arith.extui %9 : i1 to i32
    %c0_i32_9 = arith.constant 0 : i32
    %11 = arith.cmpi ne, %10, %c0_i32_9 : i32
    scf.if %11 {
      %c0_10 = arith.constant 0 : index
      %c0_11 = arith.constant 0 : index
      %12 = vector.load %arg7[%c0_10, %c0_11] : memref<8x128xf32, #tpu.memory_space<vmem>>, vector<8x128xf32>
      %cst_12 = arith.constant dense<0.000000e+00> : vector<128xf32>
      %13 = vector.multi_reduction <add>, %12, %cst_12 [0] : vector<8x128xf32> to vector<128xf32>
      %14 = vector.shape_cast %13 : vector<128xf32> to vector<1x128xf32>
      %15 = arith.mulf %12, %12 : vector<8x128xf32>
      %cst_13 = arith.constant dense<0.000000e+00> : vector<128xf32>
      %16 = vector.multi_reduction <add>, %15, %cst_13 [0] : vector<8x128xf32> to vector<128xf32>
      %17 = vector.shape_cast %16 : vector<128xf32> to vector<1x128xf32>
      %cst_14 = arith.constant 1.250000e-01 : f32
      %18 = vector.broadcast %cst_14 : f32 to vector<1x128xf32>
      %19 = arith.mulf %14, %18 : vector<1x128xf32>
      %cst_15 = arith.constant 1.250000e-01 : f32
      %20 = vector.broadcast %cst_15 : f32 to vector<1x128xf32>
      %21 = arith.mulf %17, %20 : vector<1x128xf32>
      %22 = arith.mulf %19, %19 : vector<1x128xf32>
      %23 = arith.subf %21, %22 : vector<1x128xf32>
      %cst_16 = arith.constant 0.000000e+00 : f32
      %24 = vector.broadcast %cst_16 : f32 to vector<1x128xf32>
      %25 = arith.maximumf %23, %24 : vector<1x128xf32>
      %cst_17 = arith.constant 9.99999974E-6 : f32
      %26 = vector.broadcast %cst_17 : f32 to vector<1x128xf32>
      %27 = arith.addf %25, %26 : vector<1x128xf32>
      %28 = math.rsqrt %27 : vector<1x128xf32>
      %c0_18 = arith.constant 0 : index
      %c0_19 = arith.constant 0 : index
      %29 = vector.load %arg4[%c0_18, %c0_19] : memref<1x128xf32, #tpu.memory_space<vmem>>, vector<1x128xf32>
      %30 = arith.mulf %28, %29 : vector<1x128xf32>
      %c0_20 = arith.constant 0 : index
      %c0_21 = arith.constant 0 : index
      %31 = vector.load %arg5[%c0_20, %c0_21] : memref<1x128xf32, #tpu.memory_space<vmem>>, vector<1x128xf32>
      %32 = arith.mulf %19, %30 : vector<1x128xf32>
      %33 = arith.subf %31, %32 : vector<1x128xf32>
      %34 = vector.broadcast %30 : vector<1x128xf32> to vector<8x128xf32>
      %35 = arith.mulf %12, %34 : vector<8x128xf32>
      %36 = vector.broadcast %33 : vector<1x128xf32> to vector<8x128xf32>
      %37 = arith.addf %35, %36 : vector<8x128xf32>
      %cst_22 = arith.constant 0.000000e+00 : f32
      %38 = vector.broadcast %cst_22 : f32 to vector<8x128xf32>
      %39 = arith.maximumf %37, %38 : vector<8x128xf32>
      %c0_23 = arith.constant 0 : index
      %c0_24 = arith.constant 0 : index
      %40 = vector.load %arg6[%c0_23, %c0_24] : memref<8x128xf32, #tpu.memory_space<vmem>>, vector<8x128xf32>
      tpu.vector_store %arg6[%c0_23, %c0_24], %39 {strides = array<i32>} : memref<8x128xf32, #tpu.memory_space<vmem>>, vector<8x128xf32>,
    } else {
    }
    return
  }
  func.func @transform_0(%arg0: i32, %arg1: i32) -> (i32, i32) {
    %c0_i32 = arith.constant 0 : i32
    %c0_i32_0 = arith.constant 0 : i32
    return %c0_i32, %arg1 : i32, i32
  }
  func.func @transform_1(%arg0: i32, %arg1: i32) -> (i32, i32) {
    %c0_i32 = arith.constant 0 : i32
    return %arg0, %arg1 : i32, i32
  }
  func.func @transform_2(%arg0: i32, %arg1: i32) -> (i32, i32) {
    %c0_i32 = arith.constant 0 : i32
    %c0_i32_0 = arith.constant 0 : i32
    return %c0_i32, %arg0 : i32, i32
  }
  func.func @transform_3(%arg0: i32, %arg1: i32) -> (i32, i32) {
    %c0_i32 = arith.constant 0 : i32
    %c0_i32_0 = arith.constant 0 : i32
    return %c0_i32, %arg0 : i32, i32
  }
  func.func @transform_4(%arg0: i32, %arg1: i32) -> (i32, i32) {
    %c0_i32 = arith.constant 0 : i32
    %c0_i32_0 = arith.constant 0 : i32
    return %c0_i32, %arg0 : i32, i32
  }
}

</mosaic_0001>

<llo_original>
// kernel: tpu_custom_call.1
$region0: #{tpu_custom_call.1}
  #allocation0 [shape = 'u32[]', space=smem, size = 0x4, offset = 0x4, fixed_abs, tag = 'smem constant byte address 0x4 - core index']
  #allocation1 [shape = 'u32[72,128]{1,0:T(1,128)}', space=vmem, size = 0x9000, scoped, tag = 'internal scratch']
  #allocation2 [shape = 'f32[8,128]{1,0:T(8,128)}', space=vmem, size = 0x1000, scoped, tag = 'scratch operand']
  %s0 = inlined_call_operand.vmem [shape: bf16[8,32], index: 0, kind: input, shape index: {}]
  %s1 = inlined_call_operand.vmem [shape: bf16[128,32], index: 1, kind: input, shape index: {}]
  %s2 = inlined_call_operand.vmem [shape: f32[1,128], index: 2, kind: input, shape index: {}]
  %s3 = inlined_call_operand.vmem [shape: f32[1,128], index: 3, kind: input, shape index: {}]
  %s4 = inlined_call_operand.hbm [shape: f32[8,128], index: 4, kind: output, shape index: {}]
  %s5 = sld [smem:[#allocation0]]
  $region34: #{tpu_custom_call.1} parent=0
    _
  %s7 = ssub.s32 1, %s5
  %s8 = scalar_select 0, %s7, %s5
  $region1: #{tpu_custom_call.1} parent=0
    #allocation3 [shape = 'u8[4096]{0}', space=vmem, size = 0x1000, scoped, tag = 'output window, operand 0, single buffered']
    #allocation4 [shape = 's32[1]{0}', space=sflag, size = 0x4, scoped, tag = 'scoped memory for tpu_custom_call.1']
    %9 = vsyncpa [#allocation4], 0
    // Predicated region
    $region2: #{tpu_custom_call.1} parent=1 // pred_check
      _
    $region3: #{tpu_custom_call.1} parent=1 // pred_check_branch
      %11 = sbr.rel (0) target = $region5
    $region4: #{tpu_custom_call.1} parent=1 // pred_region
      _
    $region5: #{tpu_custom_call.1} parent=1 // pred_fallthru
      _
    // Predicated region
    $region6: #{tpu_custom_call.1} parent=1 // pred_check
      _
    $region7: #{tpu_custom_call.1} parent=1 // pred_check_branch
      %13 = sbr.rel (0) target = $region9
    $region8: #{tpu_custom_call.1} parent=1 // pred_region
      _
    $region9: #{tpu_custom_call.1} parent=1 // pred_fallthru
      _
    // Predicated region
    $region10: #{tpu_custom_call.1} parent=1 // pred_check
      _
    $region11: #{tpu_custom_call.1} parent=1 // pred_check_branch
      %15 = sbr.rel (0) target = $region13
    $region12: #{tpu_custom_call.1} parent=1 // pred_region
      _
    $region13: #{tpu_custom_call.1} parent=1 // pred_fallthru
      _
    // Predicated region
    $region14: #{tpu_custom_call.1} parent=1 // pred_check
      _
    $region15: #{tpu_custom_call.1} parent=1 // pred_check_branch
      %17 = sbr.rel (0) target = $region17
    $region16: #{tpu_custom_call.1} parent=1 // pred_region
      _
    $region17: #{tpu_custom_call.1} parent=1 // pred_fallthru
      _
    %p18 = scmp.eq.s32.totalorder 0, 0
    // Predicated region
    $region18: #{tpu_custom_call.1} parent=1 // pred_check
      %p19 = pneg %p18
    $region19: #{tpu_custom_call.1} parent=1 // pred_check_branch
      %21 = sbr.rel (%p19) target = $region21
    $region20: #{tpu_custom_call.1} parent=1 // pred_region
      %22 = vst [vmem:[#allocation2] sm:$0xff] 0.0
    $region21: #{tpu_custom_call.1} parent=1 // pred_fallthru
      _
    %v23 = vld [vmem:[#allocation2] sm:$0xff]
    %v24 = vld [vmem:[%s0] sm:$0xf]
    %v25 = vld [vmem:[%s1] sm:$0xf]
    %v26 = vld [vmem:[%s1 + $0x4] sm:$0xf]
    %v27 = vld [vmem:[%s1 + $0x8] sm:$0xf]
    %v28 = vld [vmem:[%s1 + $0xc] sm:$0xf]
    %v29 = vld [vmem:[%s1 + $0x10] sm:$0xf]
    %v30 = vld [vmem:[%s1 + $0x14] sm:$0xf]
    %v31 = vld [vmem:[%s1 + $0x18] sm:$0xf]
    %v32 = vld [vmem:[%s1 + $0x1c] sm:$0xf]
    %v33 = vld [vmem:[%s1 + $0x20] sm:$0xf]
    %v34 = vld [vmem:[%s1 + $0x24] sm:$0xf]
    %v35 = vld [vmem:[%s1 + $0x28] sm:$0xf]
    %v36 = vld [vmem:[%s1 + $0x2c] sm:$0xf]
    %v37 = vld [vmem:[%s1 + $0x30] sm:$0xf]
    %v38 = vld [vmem:[%s1 + $0x34] sm:$0xf]
    %v39 = vld [vmem:[%s1 + $0x38] sm:$0xf]
    %v40 = vld [vmem:[%s1 + $0x3c] sm:$0xf]
    %v57 = vunpack.c.l.b16 %v25
    %v58 = vunpack.c.l.b16 %v26
    %v59 = vunpack.c.l.b16 %v27
    %v60 = vunpack.c.l.b16 %v28
    %v61 = vunpack.c.l.b16 %v29
    %v62 = vunpack.c.l.b16 %v30
    %v63 = vunpack.c.l.b16 %v31
    %v64 = vunpack.c.l.b16 %v32
    %v65 = vunpack.c.l.b16 %v33
    %v66 = vunpack.c.l.b16 %v34
    %v67 = vunpack.c.l.b16 %v35
    %v68 = vunpack.c.l.b16 %v36
    %v69 = vunpack.c.l.b16 %v37
    %v70 = vunpack.c.l.b16 %v38
    %v71 = vunpack.c.l.b16 %v39
    %v72 = vunpack.c.l.b16 %v40
    %v73 = vpack.c.b16 %v58, %v57
    %v74 = vpack.c.b16 %v60, %v59
    %v75 = vpack.c.b16 %v62, %v61
    %v76 = vpack.c.b16 %v64, %v63
    %v77 = vpack.c.b16 %v66, %v65
    %v78 = vpack.c.b16 %v68, %v67
    %v79 = vpack.c.b16 %v70, %v69
    %v80 = vpack.c.b16 %v72, %v71
    %vm81 = vcmask 261120
    %v83 = vsel %vm81, %v24, 0
    %v86 = vsel %vm81, %v73, 0
    %v89 = vsel %vm81, %v74, 0
    %v92 = vsel %vm81, %v75, 0
    %v95 = vsel %vm81, %v76, 0
    %v98 = vsel %vm81, %v77, 0
    %v101 = vsel %vm81, %v78, 0
    %v104 = vsel %vm81, %v79, 0
    %v107 = vsel %vm81, %v80, 0
    %109 = vmatpush.bf16.xpose.msra.mxu0 %v107
    %110 = vmatpush.bf16.xpose.msra.mxu0 %v104
    %111 = vmatpush.bf16.xpose.msra.mxu0 %v101
    %112 = vmatpush.bf16.xpose.msra.mxu0 %v98
    %113 = vmatpush.bf16.xpose.msra.mxu0 %v95
    %114 = vmatpush.bf16.xpose.msra.mxu0 %v92
    %115 = vmatpush.bf16.xpose.msra.mxu0 %v89
    %116 = vmatpush.bf16.xpose.msra.mxu0 %v86
    %117 = vmatmul.bf16.gmra.mxu0 %v83
    %v118 = vpop.f32.mrf.mxu0
    %v119 = vadd.f32 0.0, %v118
    %v120 = vpop.f32.mrf.mxu0
    %121 = vdwg.mxu0
    %v122 = vadd.f32 %v23, %v119
    %123 = vst [vmem:[#allocation2] sm:$0xff] %v122
    // Predicated region
    $region22: #{tpu_custom_call.1} parent=1 // pred_check
      %p124 = pneg %p18
    $region23: #{tpu_custom_call.1} parent=1 // pred_check_branch
      %126 = sbr.rel (%p124) target = $region25
    $region24: #{tpu_custom_call.1} parent=1 // pred_region
      %v127 = vld [vmem:[#allocation2] sm:$0xff]
      %v128 = vrot.slane %v127, 4
      %v129 = vadd.f32 %v127, %v128
      %v130 = vrot.slane %v129, 2
      %v131 = vadd.f32 %v129, %v130
      %v132 = vrot.slane %v131, 1
      %v133 = vadd.f32 %v131, %v132
      %v134 = vmul.f32 %v127, %v127
      %v135 = vrot.slane %v134, 4
      %v136 = vadd.f32 %v134, %v135
      %v137 = vrot.slane %v136, 2
      %v138 = vadd.f32 %v136, %v137
      %v139 = vrot.slane %v138, 1
      %v140 = vadd.f32 %v138, %v139
      %v141 = vmul.f32 %v133, 0.125
      %v142 = vmul.f32 %v140, 0.125
      %v143 = vmul.f32 %v141, %v141
      %v144 = vsub.f32 %v142, %v143
      %v145 = vmax.f32 %v144, 0.0
      %v146 = vadd.f32 %v145, 1e-05
      %v147 = vrsqrt.pop %v146
      %v148 = vmul.f32 %v147, %v146
      %v149 = vmul.f32 %v148, %v147
      %v150 = vmul.f32 0.5, %v149
      %v151 = vsub.f32 1.5, %v150
      %v152 = vmul.f32 %v147, %v151
      %vm153 = vweird.f32 %v146
      %vm154 = vweird.f32 %v147
      %vm155 = vmor %vm153, %vm154
      %v156 = vsel %vm155, %v147, %v152
      %v157 = vld [vmem:[%s2] sm:$0x1]
      %v158 = vmul.f32 %v156, %v157
      %v159 = vld [vmem:[%s3] sm:$0x1]
      %v160 = vmul.f32 %v141, %v158
      %v161 = vsub.f32 %v159, %v160
      %v162 = vperm.slane %v158, 0
      %v163 = vmul.f32 %v127, %v162
      %v165 = vperm.slane %v161, 0
      %v167 = vadd.f32 %v163, %v165
      %v168 = vmax.f32 %v167, 0.0
      %169 = vst [vmem:[#allocation3] sm:$0xff] %v168
    $region25: #{tpu_custom_call.1} parent=1 // pred_fallthru
      _
    // Predicated region
    $region26: #{tpu_custom_call.1} parent=1 // pred_check
      _
    $region27: #{tpu_custom_call.1} parent=1 // pred_check_branch
      %171 = sbr.rel (0) target = $region29
    $region28: #{tpu_custom_call.1} parent=1 // pred_region
      %173 = vsyncadd [#allocation4], 0
      %s175 = sshll.u32 [#allocation3], 4
      %s176 = int_to_ptr.vmem [resolvable:$true] %s175
      %s177 = sshll.u32 %s4, 4
      %s178 = int_to_ptr.hbm [resolvable:$true] %s177
      %180 = dma.vmem_to_hbm [thread:$0]  %s176, 128, %s178, [#allocation4]
    $region29: #{tpu_custom_call.1} parent=1 // pred_fallthru
      _
    // Predicated region
    $region30: #{tpu_custom_call.1} parent=1 // pred_check
      _
    $region31: #{tpu_custom_call.1} parent=1 // pred_check_branch
      %182 = sbr.rel (0) target = $region33
    $region32: #{tpu_custom_call.1} parent=1 // pred_region
      %184 = dma.done [#allocation4], 128
    $region33: #{tpu_custom_call.1} parent=1 // pred_fallthru
      _
    %185 = vsyncpa [#allocation4], 1

</llo_original>
